<compile_context>
chip_gen: v7x
topology: tpu7x:2x2x1
jax: 0.10.0
libtpu: 0.0.40
codegen_flags: <defaults>
</compile_context>

<pallas_src>
import math
from functools import partial

import jax
import jax.numpy as jnp
from jax.experimental import pallas as pl
from jax.experimental.pallas import tpu as pltpu


def _intra_att_kernel(nei_ref, logit_ref, h_ref, o_ref, acc_ref, *,
                      wbuild_dtype, mm_dtype):
    k = pl.program_id(1)                                  # V-reduction step

    @pl.when(k == 0)
    def _():
        acc_ref[...] = jnp.zeros_like(acc_ref)

    # ---- LeakyReLU + softmax over the neighbor axis (O(TN*M); tiny) ----
    s = logit_ref[...]                                    # (TN, M) f32
    s = jnp.where(s > 0, s, 0.01 * s)                     # LeakyReLU, slope 0.01
    s = s - jnp.max(s, axis=1, keepdims=True)
    e = jnp.exp(s)
    attw = e * pl.reciprocal(jnp.sum(e, axis=1, keepdims=True), approx=True)
    attw = attw.astype(wbuild_dtype)                      # bf16 on v6e/v7x, f32 on v5e

    # ---- weighted one-hot for this V tile, built with a static M-loop ----
    #   W[n, v] = sum_m attw[n, m] * [nei[n, m] == v]
    # Only a (TN, TV) value stays live; the per-m temporaries die immediately.
    idx = nei_ref[...]                                    # (TN, M) int32
    TN, M = idx.shape
    TV = h_ref.shape[0]
    v0 = k * TV                                           # global node offset of this tile
    iota_v = jax.lax.broadcasted_iota(jnp.int32, (TN, TV), 1) + v0
    zero = jnp.zeros((), dtype=wbuild_dtype)
    W = jnp.zeros((TN, TV), dtype=wbuild_dtype)
    for m in range(M):                                    # M is small & static
        hit = idx[:, m:m + 1] == iota_v                   # (TN, TV) bool
        W = W + jnp.where(hit, attw[:, m:m + 1], zero)

    # ---- single MXU matmul per step: bf16 operands, f32 accumulation ----
    acc_ref[...] += jnp.dot(W.astype(mm_dtype), h_ref[...],
                            preferred_element_type=jnp.float32)

    @pl.when(k == pl.num_programs(1) - 1)
    def _():
        o_ref[...] = acc_ref[...].astype(o_ref.dtype)


def _round_up(x, m):
    return ((x + m - 1) // m) * m


def _wbuild_dtype():
    """bf16 VPU exists on v6e/v7x; v5e (and older) lack it -> keep f32 there."""
    try:
        kind = jax.devices()[0].device_kind.lower()
    except Exception:
        return jnp.float32
    return jnp.bfloat16 if ("v6" in kind or "v7" in kind) else jnp.float32


def _vmem_limit_bytes():
    """~75% of physical VMEM (~96 MiB on v5e/v6e, ~48 MiB on v7x)."""
    try:
        cap = int(pltpu.get_tpu_info().vmem_capacity_bytes)
    except Exception:
        cap = 64 * 1024 * 1024
    return (cap * 3) // 4


def intra_att_forward(nei, h, h_refer, att, *, tile_n=256, tile_v=512,
                      lane_dense_out=True):
    N, M = nei.shape
    V, D = h.shape
    a_l = att[:, :D]                                      # applied to h_refer
    a_r = att[:, D:]                                      # applied to neighbor embeddings

    # ---- hoisted to plain XLA: both skinny matvecs + the neighbor-score gather ----
    s_ref = h_refer @ a_l.T                               # (N, 1)
    hr = (h @ a_r.T).reshape(V)                           # (V,)  per-node "right" score
    s_nei = jnp.take(hr, nei, axis=0)                     # (N, M) gather
    logits = (s_nei + s_ref).astype(jnp.float32)          # pre-LeakyReLU logits

    wb_dtype = _wbuild_dtype()
    mm_dtype = jnp.bfloat16                               # MXU is bf16-native on v5e/v6e/v7x

    # ---- padding / tiling (tiles are multiples of 8 rows; D lane-dense if requested) ----
    tile_n = max(8, (min(tile_n, _round_up(N, 8)) // 8) * 8)
    n_pad = _round_up(N, tile_n)
    tile_v = max(8, (min(tile_v, _round_up(V, 8)) // 8) * 8)
    v_pad = _round_up(V, tile_v)
    d_pad = _round_up(D, 128) if lane_dense_out else D

    if n_pad != N:
        nei = jnp.pad(nei, ((0, n_pad - N), (0, 0)))      # pad rows point at node 0 (discarded)
        logits = jnp.pad(logits, ((0, n_pad - N), (0, 0)))
    h_mm = h.astype(mm_dtype)
    if v_pad != V or d_pad != D:
        # zero rows never match a valid index; zero cols are sliced off the output
        h_mm = jnp.pad(h_mm, ((0, v_pad - V), (0, d_pad - D)))

    grid = (n_pad // tile_n, v_pad // tile_v)             # rows parallel, V reduction innermost

    kernel = partial(_intra_att_kernel, wbuild_dtype=wb_dtype, mm_dtype=mm_dtype)
    out = pl.pallas_call(
        kernel,
        out_shape=jax.ShapeDtypeStruct((n_pad, d_pad), h.dtype),
        grid_spec=pltpu.PrefetchScalarGridSpec(
            num_scalar_prefetch=0,
            grid=grid,
            in_specs=[
                pl.BlockSpec((tile_n, M), lambda i, k: (i, 0)),      # nei tile
                pl.BlockSpec((tile_n, M), lambda i, k: (i, 0)),      # pre-LeakyReLU logits tile
                pl.BlockSpec((tile_v, d_pad), lambda i, k: (k, 0)),  # bf16 node-table tile
            ],
            out_specs=pl.BlockSpec((tile_n, d_pad), lambda i, k: (i, 0)),
            scratch_shapes=[pltpu.VMEM((tile_n, d_pad), jnp.float32)],   # f32 accumulator
        ),
        compiler_params=pltpu.CompilerParams(
            dimension_semantics=("parallel", "arbitrary"),
            vmem_limit_bytes=_vmem_limit_bytes(),
        ),
    )(nei, logits, h_mm)
    return out[:N, :D]


def intra_att_reference(nei, h, h_refer, att):
    """Pure-JAX reference mirroring the PyTorch forward (eval mode)."""
    nei_emb = jnp.take(h, nei, axis=0)                    # (N, M, D)
    href = jnp.broadcast_to(h_refer[:, None, :], nei_emb.shape)
    all_emb = jnp.concatenate([href, nei_emb], axis=-1)   # (N, M, 2D)
    logits = all_emb @ att.T                              # (N, M, 1)
    logits = jnp.where(logits > 0, logits, 0.01 * logits)
    w = jax.nn.softmax(logits, axis=1)
    return jnp.sum(w * nei_emb, axis=1)                   # (N, D)


if __name__ == "__main__":
    key = jax.random.PRNGKey(0)
    k_nei, k_h, k_ref, k_att = jax.random.split(key, 4)

    N, M, V, D = 16, 8, 32, 32      # targets, neighbors-per-target, node table, hidden_dim

    nei = jax.random.randint(k_nei, (N, M), 0, V, dtype=jnp.int32)
    h = jax.random.normal(k_h, (V, D), dtype=jnp.float32)
    h_refer = jax.random.normal(k_ref, (N, D), dtype=jnp.float32)

    # nn.init.xavier_normal_(att, gain=1.414) on shape (1, 2D)
    gain = 1.414
    std = gain * math.sqrt(2.0 / (1 + 2 * D))
    att = std * jax.random.normal(k_att, (1, 2 * D), dtype=jnp.float32)

    out = intra_att_forward(nei, h, h_refer, att)
    out = jax.block_until_ready(out)

    ref = intra_att_reference(nei, h, h_refer, att)
    assert out.shape == (N, D)
    # Tolerance reflects the bf16 matmul operands (f32 accumulation) and the EUP
    # approximate reciprocal in the softmax denominator.
    assert jnp.allclose(out, ref, atol=2e-2, rtol=2e-2), "mismatch vs reference"

    print("KERNEL_OK")
</pallas_src>

<mosaic_0001>
module attributes {stable_mosaic.version = 11 : i64} {
  func.func @_intra_att_kernel(%arg0: i32, %arg1: i32, %arg2: memref<16x8xi32, #tpu.memory_space<vmem>>, %arg3: memref<16x8xf32, #tpu.memory_space<vmem>>, %arg4: memref<32x128xbf16, #tpu.memory_space<vmem>>, %arg5: memref<16x128xf32, #tpu.memory_space<vmem>>, %arg6: memref<16x128xf32, #tpu.memory_space<vmem>>) attributes {dimension_semantics = [#tpu.dimension_semantics<parallel>, #tpu.dimension_semantics<arbitrary>], iteration_bounds = array<i64: 1, 1>, scalar_prefetch = 0 : i64, scratch_operands = 1 : i64, tpu.core_type = #tpu.core_type<tc>, window_params = [{transform_indices = @transform_0, window_bounds = array<i64: 16, 8>}, {transform_indices = @transform_1, window_bounds = array<i64: 16, 8>}, {transform_indices = @transform_2, window_bounds = array<i64: 32, 128>}, {transform_indices = @transform_3, window_bounds = array<i64: 16, 128>}]} {
    %c0_i32 = arith.constant 0 : i32
    %0 = arith.cmpi eq, %arg1, %c0_i32 : i32
    %1 = arith.extui %0 : i1 to i32
    %c0_i32_0 = arith.constant 0 : i32
    %2 = arith.cmpi ne, %1, %c0_i32_0 : i32
    scf.if %2 {
      %cst_25 = arith.constant 0.000000e+00 : f32
      %106 = vector.broadcast %cst_25 : f32 to vector<16x128xf32>
      %c0_26 = arith.constant 0 : index
      %c0_27 = arith.constant 0 : index
      %107 = vector.load %arg6[%c0_26, %c0_27] : memref<16x128xf32, #tpu.memory_space<vmem>>, vector<16x128xf32>
      tpu.vector_store %arg6[%c0_26, %c0_27], %106 {strides = array<i32>} : memref<16x128xf32, #tpu.memory_space<vmem>>, vector<16x128xf32>,
    } else {
    }
    %c0 = arith.constant 0 : index
    %c0_1 = arith.constant 0 : index
    %3 = vector.load %arg3[%c0, %c0_1] : memref<16x8xf32, #tpu.memory_space<vmem>>, vector<16x8xf32>
    %cst = arith.constant 0.000000e+00 : f32
    %4 = vector.broadcast %cst : f32 to vector<16x8xf32>
    %5 = arith.cmpf ogt, %3, %4 : vector<16x8xf32>
    %cst_2 = arith.constant 0.00999999977 : f32
    %6 = vector.broadcast %cst_2 : f32 to vector<16x8xf32>
    %7 = arith.mulf %6, %3 : vector<16x8xf32>
    %8 = arith.select %5, %3, %7 : vector<16x8xi1>, vector<16x8xf32>
    %cst_3 = arith.constant dense<0xFF800000> : vector<16xf32>
    %9 = vector.multi_reduction <maximumf>, %8, %cst_3 [1] : vector<16x8xf32> to vector<16xf32>
    %10 = vector.shape_cast %9 : vector<16xf32> to vector<16x1xf32>
    %11 = vector.broadcast %10 : vector<16x1xf32> to vector<16x8xf32>
    %12 = arith.subf %8, %11 : vector<16x8xf32>
    %13 = math.exp %12 : vector<16x8xf32>
    %cst_4 = arith.constant dense<0.000000e+00> : vector<16xf32>
    %14 = vector.multi_reduction <add>, %13, %cst_4 [1] : vector<16x8xf32> to vector<16xf32>
    %15 = vector.shape_cast %14 : vector<16xf32> to vector<16x1xf32>
    %16 = tpu.reciprocal %15 {approx = true} : vector<16x1xf32> -> vector<16x1xf32>
    %17 = vector.broadcast %16 : vector<16x1xf32> to vector<16x8xf32>
    %18 = arith.mulf %13, %17 : vector<16x8xf32>
    %c0_5 = arith.constant 0 : index
    %c0_6 = arith.constant 0 : index
    %19 = vector.load %arg2[%c0_5, %c0_6] : memref<16x8xi32, #tpu.memory_space<vmem>>, vector<16x8xi32>
    %c32_i32 = arith.constant 32 : i32
    %20 = arith.muli %arg1, %c32_i32 : i32
    %21 = tpu.iota {dimensions = array<i32: 1>} : vector<16x32xi32>
    %22 = vector.broadcast %20 : i32 to vector<16x32xi32>
    %23 = arith.addi %21, %22 : vector<16x32xi32>
    %cst_7 = arith.constant 0.000000e+00 : f32
    %24 = vector.broadcast %cst_7 : f32 to vector<16x32xf32>
    %25 = vector.extract_strided_slice %19 {offsets = [0, 0], sizes = [16, 1], strides = [1, 1]} : vector<16x8xi32> to vector<16x1xi32>
    %26 = vector.broadcast %25 : vector<16x1xi32> to vector<16x32xi32>
    %27 = arith.cmpi eq, %26, %23 : vector<16x32xi32>
    %28 = vector.extract_strided_slice %18 {offsets = [0, 0], sizes = [16, 1], strides = [1, 1]} : vector<16x8xf32> to vector<16x1xf32>
    %cst_8 = arith.constant 0.000000e+00 : f32
    %29 = vector.shape_cast %28 : vector<16x1xf32> to vector<16x1xf32>
    %30 = vector.broadcast %29 : vector<16x1xf32> to vector<16x32xf32>
    %31 = vector.broadcast %cst_8 : f32 to vector<16x32xf32>
    %32 = arith.select %27, %30, %31 : vector<16x32xi1>, vector<16x32xf32>
    %33 = arith.addf %24, %32 : vector<16x32xf32>
    %34 = vector.extract_strided_slice %19 {offsets = [0, 1], sizes = [16, 1], strides = [1, 1]} : vector<16x8xi32> to vector<16x1xi32>
    %35 = vector.broadcast %34 : vector<16x1xi32> to vector<16x32xi32>
    %36 = arith.cmpi eq, %35, %23 : vector<16x32xi32>
    %37 = vector.extract_strided_slice %18 {offsets = [0, 1], sizes = [16, 1], strides = [1, 1]} : vector<16x8xf32> to vector<16x1xf32>
    %cst_9 = arith.constant 0.000000e+00 : f32
    %38 = vector.shape_cast %37 : vector<16x1xf32> to vector<16x1xf32>
    %39 = vector.broadcast %38 : vector<16x1xf32> to vector<16x32xf32>
    %40 = vector.broadcast %cst_9 : f32 to vector<16x32xf32>
    %41 = arith.select %36, %39, %40 : vector<16x32xi1>, vector<16x32xf32>
    %42 = arith.addf %33, %41 : vector<16x32xf32>
    %43 = vector.extract_strided_slice %19 {offsets = [0, 2], sizes = [16, 1], strides = [1, 1]} : vector<16x8xi32> to vector<16x1xi32>
    %44 = vector.broadcast %43 : vector<16x1xi32> to vector<16x32xi32>
    %45 = arith.cmpi eq, %44, %23 : vector<16x32xi32>
    %46 = vector.extract_strided_slice %18 {offsets = [0, 2], sizes = [16, 1], strides = [1, 1]} : vector<16x8xf32> to vector<16x1xf32>
    %cst_10 = arith.constant 0.000000e+00 : f32
    %47 = vector.shape_cast %46 : vector<16x1xf32> to vector<16x1xf32>
    %48 = vector.broadcast %47 : vector<16x1xf32> to vector<16x32xf32>
    %49 = vector.broadcast %cst_10 : f32 to vector<16x32xf32>
    %50 = arith.select %45, %48, %49 : vector<16x32xi1>, vector<16x32xf32>
    %51 = arith.addf %42, %50 : vector<16x32xf32>
    %52 = vector.extract_strided_slice %19 {offsets = [0, 3], sizes = [16, 1], strides = [1, 1]} : vector<16x8xi32> to vector<16x1xi32>
    %53 = vector.broadcast %52 : vector<16x1xi32> to vector<16x32xi32>
    %54 = arith.cmpi eq, %53, %23 : vector<16x32xi32>
    %55 = vector.extract_strided_slice %18 {offsets = [0, 3], sizes = [16, 1], strides = [1, 1]} : vector<16x8xf32> to vector<16x1xf32>
    %cst_11 = arith.constant 0.000000e+00 : f32
    %56 = vector.shape_cast %55 : vector<16x1xf32> to vector<16x1xf32>
    %57 = vector.broadcast %56 : vector<16x1xf32> to vector<16x32xf32>
    %58 = vector.broadcast %cst_11 : f32 to vector<16x32xf32>
    %59 = arith.select %54, %57, %58 : vector<16x32xi1>, vector<16x32xf32>
    %60 = arith.addf %51, %59 : vector<16x32xf32>
    %61 = vector.extract_strided_slice %19 {offsets = [0, 4], sizes = [16, 1], strides = [1, 1]} : vector<16x8xi32> to vector<16x1xi32>
    %62 = vector.broadcast %61 : vector<16x1xi32> to vector<16x32xi32>
    %63 = arith.cmpi eq, %62, %23 : vector<16x32xi32>
    %64 = vector.extract_strided_slice %18 {offsets = [0, 4], sizes = [16, 1], strides = [1, 1]} : vector<16x8xf32> to vector<16x1xf32>
    %cst_12 = arith.constant 0.000000e+00 : f32
    %65 = vector.shape_cast %64 : vector<16x1xf32> to vector<16x1xf32>
    %66 = vector.broadcast %65 : vector<16x1xf32> to vector<16x32xf32>
    %67 = vector.broadcast %cst_12 : f32 to vector<16x32xf32>
    %68 = arith.select %63, %66, %67 : vector<16x32xi1>, vector<16x32xf32>
    %69 = arith.addf %60, %68 : vector<16x32xf32>
    %70 = vector.extract_strided_slice %19 {offsets = [0, 5], sizes = [16, 1], strides = [1, 1]} : vector<16x8xi32> to vector<16x1xi32>
    %71 = vector.broadcast %70 : vector<16x1xi32> to vector<16x32xi32>
    %72 = arith.cmpi eq, %71, %23 : vector<16x32xi32>
    %73 = vector.extract_strided_slice %18 {offsets = [0, 5], sizes = [16, 1], strides = [1, 1]} : vector<16x8xf32> to vector<16x1xf32>
    %cst_13 = arith.constant 0.000000e+00 : f32
    %74 = vector.shape_cast %73 : vector<16x1xf32> to vector<16x1xf32>
    %75 = vector.broadcast %74 : vector<16x1xf32> to vector<16x32xf32>
    %76 = vector.broadcast %cst_13 : f32 to vector<16x32xf32>
    %77 = arith.select %72, %75, %76 : vector<16x32xi1>, vector<16x32xf32>
    %78 = arith.addf %69, %77 : vector<16x32xf32>
    %79 = vector.extract_strided_slice %19 {offsets = [0, 6], sizes = [16, 1], strides = [1, 1]} : vector<16x8xi32> to vector<16x1xi32>
    %80 = vector.broadcast %79 : vector<16x1xi32> to vector<16x32xi32>
    %81 = arith.cmpi eq, %80, %23 : vector<16x32xi32>
    %82 = vector.extract_strided_slice %18 {offsets = [0, 6], sizes = [16, 1], strides = [1, 1]} : vector<16x8xf32> to vector<16x1xf32>
    %cst_14 = arith.constant 0.000000e+00 : f32
    %83 = vector.shape_cast %82 : vector<16x1xf32> to vector<16x1xf32>
    %84 = vector.broadcast %83 : vector<16x1xf32> to vector<16x32xf32>
    %85 = vector.broadcast %cst_14 : f32 to vector<16x32xf32>
    %86 = arith.select %81, %84, %85 : vector<16x32xi1>, vector<16x32xf32>
    %87 = arith.addf %78, %86 : vector<16x32xf32>
    %88 = vector.extract_strided_slice %19 {offsets = [0, 7], sizes = [16, 1], strides = [1, 1]} : vector<16x8xi32> to vector<16x1xi32>
    %89 = vector.broadcast %88 : vector<16x1xi32> to vector<16x32xi32>
    %90 = arith.cmpi eq, %89, %23 : vector<16x32xi32>
    %91 = vector.extract_strided_slice %18 {offsets = [0, 7], sizes = [16, 1], strides = [1, 1]} : vector<16x8xf32> to vector<16x1xf32>
    %cst_15 = arith.constant 0.000000e+00 : f32
    %92 = vector.shape_cast %91 : vector<16x1xf32> to vector<16x1xf32>
    %93 = vector.broadcast %92 : vector<16x1xf32> to vector<16x32xf32>
    %94 = vector.broadcast %cst_15 : f32 to vector<16x32xf32>
    %95 = arith.select %90, %93, %94 : vector<16x32xi1>, vector<16x32xf32>
    %96 = arith.addf %87, %95 : vector<16x32xf32>
    %c0_16 = arith.constant 0 : index
    %c0_17 = arith.constant 0 : index
    %97 = vector.load %arg6[%c0_16, %c0_17] : memref<16x128xf32, #tpu.memory_space<vmem>>, vector<16x128xf32>
    %98 = arith.truncf %96 : vector<16x32xf32> to vector<16x32xbf16>
    %c0_18 = arith.constant 0 : index
    %c0_19 = arith.constant 0 : index
    %99 = vector.load %arg4[%c0_18, %c0_19] : memref<32x128xbf16, #tpu.memory_space<vmem>>, vector<32x128xbf16>
    %cst_20 = arith.constant dense<0.000000e+00> : vector<16x128xf32>
    %100 = tpu.matmul %98, %99, %cst_20 {dimension_numbers = #tpu.dot_dimension_numbers<[1], [0], [0], [1], [0, 0, 1, 1], [], []>} : vector<16x32xbf16>, vector<32x128xbf16>, vector<16x128xf32> -> vector<16x128xf32>
    %101 = arith.addf %97, %100 : vector<16x128xf32>
    %c0_21 = arith.constant 0 : index
    %c0_22 = arith.constant 0 : index
    %102 = vector.load %arg6[%c0_21, %c0_22] : memref<16x128xf32, #tpu.memory_space<vmem>>, vector<16x128xf32>
    tpu.vector_store %arg6[%c0_21, %c0_22], %101 {strides = array<i32>} : memref<16x128xf32, #tpu.memory_space<vmem>>, vector<16x128xf32>,
    %c0_i32_23 = arith.constant 0 : i32
    %103 = arith.cmpi eq, %arg1, %c0_i32_23 : i32
    %104 = arith.extui %103 : i1 to i32
    %c0_i32_24 = arith.constant 0 : i32
    %105 = arith.cmpi ne, %104, %c0_i32_24 : i32
    scf.if %105 {
      %c0_25 = arith.constant 0 : index
      %c0_26 = arith.constant 0 : index
      %106 = vector.load %arg6[%c0_25, %c0_26] : memref<16x128xf32, #tpu.memory_space<vmem>>, vector<16x128xf32>
      %c0_27 = arith.constant 0 : index
      %c0_28 = arith.constant 0 : index
      %107 = vector.load %arg5[%c0_27, %c0_28] : memref<16x128xf32, #tpu.memory_space<vmem>>, vector<16x128xf32>
      tpu.vector_store %arg5[%c0_27, %c0_28], %106 {strides = array<i32>} : memref<16x128xf32, #tpu.memory_space<vmem>>, vector<16x128xf32>,
    } else {
    }
    return
  }
  func.func @transform_0(%arg0: i32, %arg1: i32) -> (i32, i32) {
    %c0_i32 = arith.constant 0 : i32
    %c0_i32_0 = arith.constant 0 : i32
    return %arg0, %c0_i32 : i32, i32
  }
  func.func @transform_1(%arg0: i32, %arg1: i32) -> (i32, i32) {
    %c0_i32 = arith.constant 0 : i32
    %c0_i32_0 = arith.constant 0 : i32
    return %arg0, %c0_i32 : i32, i32
  }
  func.func @transform_2(%arg0: i32, %arg1: i32) -> (i32, i32) {
    %c0_i32 = arith.constant 0 : i32
    %c0_i32_0 = arith.constant 0 : i32
    return %arg1, %c0_i32 : i32, i32
  }
  func.func @transform_3(%arg0: i32, %arg1: i32) -> (i32, i32) {
    %c0_i32 = arith.constant 0 : i32
    %c0_i32_0 = arith.constant 0 : i32
    return %arg0, %c0_i32 : i32, i32
  }
}

</mosaic_0001>

<llo_original>
// kernel: tpu_custom_call.1
$region0: #{tpu_custom_call.1}
  #allocation0 [shape = 'u32[]', space=smem, size = 0x4, offset = 0x4, fixed_abs, tag = 'smem constant byte address 0x4 - core index']
  #allocation1 [shape = 'u32[144,128]{1,0:T(1,128)}', space=vmem, size = 0x12000, scoped, tag = 'internal scratch']
  #allocation2 [shape = 'f32[16,128]{1,0:T(8,128)}', space=vmem, size = 0x2000, scoped, tag = 'scratch operand']
  %s0 = inlined_call_operand.vmem [shape: s32[16,8], index: 0, kind: input, shape index: {}]
  %s1 = inlined_call_operand.vmem [shape: f32[16,8], index: 1, kind: input, shape index: {}]
  %s2 = inlined_call_operand.vmem [shape: bf16[32,128], index: 2, kind: input, shape index: {}]
  %s3 = inlined_call_operand.hbm [shape: f32[16,128], index: 3, kind: output, shape index: {}]
  %s4 = sld [smem:[#allocation0]]
  $region30: #{tpu_custom_call.1} parent=0
    _
  %s6 = ssub.s32 1, %s4
  %s7 = scalar_select 0, %s6, %s4
  $region1: #{tpu_custom_call.1} parent=0
    #allocation3 [shape = 'u8[8192]{0}', space=vmem, size = 0x2000, scoped, tag = 'output window, operand 0, single buffered']
    #allocation4 [shape = 's32[1]{0}', space=sflag, size = 0x4, scoped, tag = 'scoped memory for tpu_custom_call.1']
    %8 = vsyncpa [#allocation4], 0
    // Predicated region
    $region2: #{tpu_custom_call.1} parent=1 // pred_check
      _
    $region3: #{tpu_custom_call.1} parent=1 // pred_check_branch
      %10 = sbr.rel (0) target = $region5
    $region4: #{tpu_custom_call.1} parent=1 // pred_region
      _
    $region5: #{tpu_custom_call.1} parent=1 // pred_fallthru
      _
    // Predicated region
    $region6: #{tpu_custom_call.1} parent=1 // pred_check
      _
    $region7: #{tpu_custom_call.1} parent=1 // pred_check_branch
      %12 = sbr.rel (0) target = $region9
    $region8: #{tpu_custom_call.1} parent=1 // pred_region
      _
    $region9: #{tpu_custom_call.1} parent=1 // pred_fallthru
      _
    // Predicated region
    $region10: #{tpu_custom_call.1} parent=1 // pred_check
      _
    $region11: #{tpu_custom_call.1} parent=1 // pred_check_branch
      %14 = sbr.rel (0) target = $region13
    $region12: #{tpu_custom_call.1} parent=1 // pred_region
      _
    $region13: #{tpu_custom_call.1} parent=1 // pred_fallthru
      _
    %p16 = scmp.eq.s32.totalorder 0, 0
    // Predicated region
    $region14: #{tpu_custom_call.1} parent=1 // pred_check
      %p17 = pneg %p16
    $region15: #{tpu_custom_call.1} parent=1 // pred_check_branch
      %19 = sbr.rel (%p17) target = $region17
    $region16: #{tpu_custom_call.1} parent=1 // pred_region
      %20 = vst [vmem:[#allocation2] sm:$0xff] 0.0
      %21 = vst [vmem:[#allocation2 + $0x8] sm:$0xff] 0.0
    $region17: #{tpu_custom_call.1} parent=1 // pred_fallthru
      _
    %v22 = vld [vmem:[%s1] sm:$0xff]
    %v23 = vld [vmem:[%s1 + $0x8] sm:$0xff]
    %vm24 = vcmp.gt.f32.partialorder %v22, 0.0
    %vm25 = vcmp.gt.f32.partialorder %v23, 0.0
    %v26 = vmul.f32 %v22, 0.01
    %v27 = vmul.f32 %v23, 0.01
    %v28 = vsel %vm24, %v22, %v26
    %v29 = vsel %vm25, %v23, %v27
    %vm30 = vcmask 64512
    %v31 = vsel %vm30, %v28, -inf
    %32 = vmax.xlane.f32.xlu0 %v31
    %v33 = vpop.xlane.xlu0 %32
    %v34 = vsel %vm30, %v29, -inf
    %35 = vmax.xlane.f32.xlu0 %v34
    %v36 = vpop.xlane.xlu0 %35
    %v37 = vsub.f32 %v28, %v33
    %v38 = vsub.f32 %v29, %v36
    %v39 = vmul.f32 %v37, 1.442695
    %v40 = vpow.pop %v39
    %v41 = vmul.f32 %v38, 1.442695
    %v42 = vpow.pop %v41
    %v43 = vsel %vm30, %v40, 0.0
    %44 = vadd.xlane.f32.xlu0 %v43
    %v45 = vpop.xlane.xlu0 %44
    %v46 = vsel %vm30, %v42, 0.0
    %47 = vadd.xlane.f32.xlu0 %v46
    %v48 = vpop.xlane.xlu0 %47
    %v49 = vrcp.pop %v45
    %v50 = vrcp.pop %v48
    %v51 = vmul.f32 %v40, %v49
    %v52 = vmul.f32 %v42, %v50
    %v53 = vld [vmem:[%s0] sm:$0xff]
    %v54 = vld [vmem:[%s0 + $0x8] sm:$0xff]
    %s55 = smul.u32 0, 32
    %v56 = vlaneseq
    %v57 = vand.u32 %v56, 127
    %v58 = vstv %s55
    %v59 = vadd.s32 %v57, %v58
    %60 = vset.pattern.permute.xlu0 0
    %61 = vperm.xlu0 %60, %v53
    %v62 = vpop.permute.xlu0 %61
    %63 = vset.pattern.permute.xlu0 0
    %64 = vperm.xlu0 %63, %v54
    %v65 = vpop.permute.xlu0 %64
    %vm66 = vcmp.eq.s32.totalorder %v62, %v59
    %vm67 = vcmp.eq.s32.totalorder %v65, %v59
    %69 = vset.pattern.permute.xlu0 0
    %70 = vperm.xlu0 %69, %v51
    %v71 = vpop.permute.xlu0 %70
    %74 = vset.pattern.permute.xlu0 0
    %75 = vperm.xlu0 %74, %v52
    %v76 = vpop.permute.xlu0 %75
    %v78 = vsel %vm66, %v71, 0.0
    %v79 = vsel %vm67, %v76, 0.0
    %v80 = vadd.f32 %v78, 0.0
    %v81 = vadd.f32 %v79, 0.0
    %82 = vset.pattern.permute.xlu0 1
    %83 = vperm.xlu0 %82, %v53
    %v84 = vpop.permute.xlu0 %83
    %85 = vset.pattern.permute.xlu0 1
    %86 = vperm.xlu0 %85, %v54
    %v87 = vpop.permute.xlu0 %86
    %vm88 = vcmp.eq.s32.totalorder %v84, %v59
    %vm89 = vcmp.eq.s32.totalorder %v87, %v59
    %90 = vset.pattern.permute.xlu0 1
    %91 = vperm.xlu0 %90, %v51
    %v92 = vpop.permute.xlu0 %91
    %94 = vset.pattern.permute.xlu0 1
    %95 = vperm.xlu0 %94, %v52
    %v96 = vpop.permute.xlu0 %95
    %v98 = vsel %vm88, %v92, 0.0
    %v99 = vsel %vm89, %v96, 0.0
    %v100 = vadd.f32 %v80, %v98
    %v101 = vadd.f32 %v81, %v99
    %102 = vset.pattern.permute.xlu0 2
    %103 = vperm.xlu0 %102, %v53
    %v104 = vpop.permute.xlu0 %103
    %105 = vset.pattern.permute.xlu0 2
    %106 = vperm.xlu0 %105, %v54
    %v107 = vpop.permute.xlu0 %106
    %vm108 = vcmp.eq.s32.totalorder %v104, %v59
    %vm109 = vcmp.eq.s32.totalorder %v107, %v59
    %110 = vset.pattern.permute.xlu0 2
    %111 = vperm.xlu0 %110, %v51
    %v112 = vpop.permute.xlu0 %111
    %114 = vset.pattern.permute.xlu0 2
    %115 = vperm.xlu0 %114, %v52
    %v116 = vpop.permute.xlu0 %115
    %v118 = vsel %vm108, %v112, 0.0
    %v119 = vsel %vm109, %v116, 0.0
    %v120 = vadd.f32 %v100, %v118
    %v121 = vadd.f32 %v101, %v119
    %122 = vset.pattern.permute.xlu0 3
    %123 = vperm.xlu0 %122, %v53
    %v124 = vpop.permute.xlu0 %123
    %125 = vset.pattern.permute.xlu0 3
    %126 = vperm.xlu0 %125, %v54
    %v127 = vpop.permute.xlu0 %126
    %vm128 = vcmp.eq.s32.totalorder %v124, %v59
    %vm129 = vcmp.eq.s32.totalorder %v127, %v59
    %130 = vset.pattern.permute.xlu0 3
    %131 = vperm.xlu0 %130, %v51
    %v132 = vpop.permute.xlu0 %131
    %134 = vset.pattern.permute.xlu0 3
    %135 = vperm.xlu0 %134, %v52
    %v136 = vpop.permute.xlu0 %135
    %v138 = vsel %vm128, %v132, 0.0
    %v139 = vsel %vm129, %v136, 0.0
    %v140 = vadd.f32 %v120, %v138
    %v141 = vadd.f32 %v121, %v139
    %142 = vset.pattern.permute.xlu0 4
    %143 = vperm.xlu0 %142, %v53
    %v144 = vpop.permute.xlu0 %143
    %145 = vset.pattern.permute.xlu0 4
    %146 = vperm.xlu0 %145, %v54
    %v147 = vpop.permute.xlu0 %146
    %vm148 = vcmp.eq.s32.totalorder %v144, %v59
    %vm149 = vcmp.eq.s32.totalorder %v147, %v59
    %150 = vset.pattern.permute.xlu0 4
    %151 = vperm.xlu0 %150, %v51
    %v152 = vpop.permute.xlu0 %151
    %154 = vset.pattern.permute.xlu0 4
    %155 = vperm.xlu0 %154, %v52
    %v156 = vpop.permute.xlu0 %155
    %v158 = vsel %vm148, %v152, 0.0
    %v159 = vsel %vm149, %v156, 0.0
    %v160 = vadd.f32 %v140, %v158
    %v161 = vadd.f32 %v141, %v159
    %162 = vset.pattern.permute.xlu0 5
    %163 = vperm.xlu0 %162, %v53
    %v164 = vpop.permute.xlu0 %163
    %165 = vset.pattern.permute.xlu0 5
    %166 = vperm.xlu0 %165, %v54
    %v167 = vpop.permute.xlu0 %166
    %vm168 = vcmp.eq.s32.totalorder %v164, %v59
    %vm169 = vcmp.eq.s32.totalorder %v167, %v59
    %170 = vset.pattern.permute.xlu0 5
    %171 = vperm.xlu0 %170, %v51
    %v172 = vpop.permute.xlu0 %171
    %174 = vset.pattern.permute.xlu0 5
    %175 = vperm.xlu0 %174, %v52
    %v176 = vpop.permute.xlu0 %175
    %v178 = vsel %vm168, %v172, 0.0
    %v179 = vsel %vm169, %v176, 0.0
    %v180 = vadd.f32 %v160, %v178
    %v181 = vadd.f32 %v161, %v179
    %182 = vset.pattern.permute.xlu0 6
    %183 = vperm.xlu0 %182, %v53
    %v184 = vpop.permute.xlu0 %183
    %185 = vset.pattern.permute.xlu0 6
    %186 = vperm.xlu0 %185, %v54
    %v187 = vpop.permute.xlu0 %186
    %vm188 = vcmp.eq.s32.totalorder %v184, %v59
    %vm189 = vcmp.eq.s32.totalorder %v187, %v59
    %190 = vset.pattern.permute.xlu0 6
    %191 = vperm.xlu0 %190, %v51
    %v192 = vpop.permute.xlu0 %191
    %194 = vset.pattern.permute.xlu0 6
    %195 = vperm.xlu0 %194, %v52
    %v196 = vpop.permute.xlu0 %195
    %v198 = vsel %vm188, %v192, 0.0
    %v199 = vsel %vm189, %v196, 0.0
    %v200 = vadd.f32 %v180, %v198
    %v201 = vadd.f32 %v181, %v199
    %202 = vset.pattern.permute.xlu0 7
    %203 = vperm.xlu0 %202, %v53
    %v204 = vpop.permute.xlu0 %203
    %205 = vset.pattern.permute.xlu0 7
    %206 = vperm.xlu0 %205, %v54
    %v207 = vpop.permute.xlu0 %206
    %vm208 = vcmp.eq.s32.totalorder %v204, %v59
    %vm209 = vcmp.eq.s32.totalorder %v207, %v59
    %210 = vset.pattern.permute.xlu0 7
    %211 = vperm.xlu0 %210, %v51
    %v212 = vpop.permute.xlu0 %211
    %214 = vset.pattern.permute.xlu0 7
    %215 = vperm.xlu0 %214, %v52
    %v216 = vpop.permute.xlu0 %215
    %v218 = vsel %vm208, %v212, 0.0
    %v219 = vsel %vm209, %v216, 0.0
    %v220 = vadd.f32 %v200, %v218
    %v221 = vadd.f32 %v201, %v219
    %v222 = vld [vmem:[#allocation2] sm:$0xff]
    %v223 = vld [vmem:[#allocation2 + $0x8] sm:$0xff]
    %v224 = vpack.c.bf16 %v221, %v220
    %v225 = vld [vmem:[%s2] sm:$0xf]
    %v226 = vld [vmem:[%s2 + $0x4] sm:$0xf]
    %v227 = vld [vmem:[%s2 + $0x8] sm:$0xf]
    %v228 = vld [vmem:[%s2 + $0xc] sm:$0xf]
    %v233 = vunpack.c.l.b16 %v225
    %v234 = vunpack.c.l.b16 %v226
    %v235 = vunpack.c.l.b16 %v227
    %v236 = vunpack.c.l.b16 %v228
    %v237 = vpack.c.b16 %v234, %v233
    %v238 = vpack.c.b16 %v236, %v235
    %vm241 = vcmask 261120
    %v243 = vsel %vm241, %v224, 0
    %245 = vmatprep.subr.bf16.mxu0 0
    %246 = vmatpush1.bf16.msra.mxu0 %v237
    %247 = vmatprep.subr.bf16.mxu0 0
    %248 = vmatpush1.bf16.msra.mxu0 %v238
    %249 = vmatprep.subr.bf16.mxu0 0
    %250 = vmatpush1.bf16.msra.mxu0 0
    %251 = vmatprep.subr.bf16.mxu0 0
    %252 = vmatpush1.bf16.msra.mxu0 0
    %253 = vmatprep.subr.bf16.mxu0 0
    %254 = vmatpush1.bf16.msra.mxu0 0
    %255 = vmatprep.subr.bf16.mxu0 0
    %256 = vmatpush1.bf16.msra.mxu0 0
    %257 = vmatprep.subr.bf16.mxu0 0
    %258 = vmatpush1.bf16.msra.mxu0 0
    %259 = vmatprep.subr.bf16.mxu0 0
    %260 = vmatpush1.bf16.msra.mxu0 0
    %261 = vmatprep.subr.bf16.mxu0 0
    %262 = vmatpush1.bf16.msra.mxu0 0
    %263 = vmatprep.subr.bf16.mxu0 0
    %264 = vmatpush1.bf16.msra.mxu0 0
    %265 = vmatprep.subr.bf16.mxu0 0
    %266 = vmatpush1.bf16.msra.mxu0 0
    %267 = vmatprep.subr.bf16.mxu0 0
    %268 = vmatpush1.bf16.msra.mxu0 0
    %269 = vmatprep.subr.bf16.mxu0 0
    %270 = vmatpush1.bf16.msra.mxu0 0
    %271 = vmatprep.subr.bf16.mxu0 0
    %272 = vmatpush1.bf16.msra.mxu0 0
    %273 = vmatprep.subr.bf16.mxu0 0
    %274 = vmatpush1.bf16.msra.mxu0 0
    %275 = vmatprep.subr.bf16.mxu0 0
    %276 = vmatpush1.bf16.msra.mxu0 0
    %277 = vmatprep.mubr.bf16.mxu0 0
    %278 = vmatmul.mubr.bf16.gmra.mrb[0].mxu0 %v243
    %v279 = vpop.f32.mrb[0].mxu0
    %v280 = vadd.f32 0.0, %v279
    %v281 = vpop.f32.mrb[0].mxu0
    %v282 = vpop.f32.mrb[0].mxu0
    %v283 = vadd.f32 0.0, %v282
    %v284 = vpop.f32.mrb[0].mxu0
    %285 = vdwg.mxu0
    %v286 = vadd.f32 %v222, %v280
    %v287 = vadd.f32 %v223, %v283
    %288 = vst [vmem:[#allocation2] sm:$0xff] %v286
    %289 = vst [vmem:[#allocation2 + $0x8] sm:$0xff] %v287
    // Predicated region
    $region18: #{tpu_custom_call.1} parent=1 // pred_check
      %p290 = pneg %p16
    $region19: #{tpu_custom_call.1} parent=1 // pred_check_branch
      %292 = sbr.rel (%p290) target = $region21
    $region20: #{tpu_custom_call.1} parent=1 // pred_region
      %v293 = vld [vmem:[#allocation2] sm:$0xff]
      %v294 = vld [vmem:[#allocation2 + $0x8] sm:$0xff]
      %295 = vst [vmem:[#allocation3] sm:$0xff] %v293
      %296 = vst [vmem:[#allocation3 + $0x8] sm:$0xff] %v294
    $region21: #{tpu_custom_call.1} parent=1 // pred_fallthru
      _
    // Predicated region
    $region22: #{tpu_custom_call.1} parent=1 // pred_check
      _
    $region23: #{tpu_custom_call.1} parent=1 // pred_check_branch
      %298 = sbr.rel (0) target = $region25
    $region24: #{tpu_custom_call.1} parent=1 // pred_region
      %s300 = ssub.s32 256, 256
      %301 = vsyncadd [#allocation4], %s300
      %s302 = sshll.u32 [#allocation3], 4
      %s303 = int_to_ptr.vmem [resolvable:$true] %s302
      %308 = dma.vmem_to_hbm [thread:$0]  %s303, 256, %s3, [#allocation4], 128, 128, 8
    $region25: #{tpu_custom_call.1} parent=1 // pred_fallthru
      _
    // Predicated region
    $region26: #{tpu_custom_call.1} parent=1 // pred_check
      _
    $region27: #{tpu_custom_call.1} parent=1 // pred_check_branch
      %310 = sbr.rel (0) target = $region29
    $region28: #{tpu_custom_call.1} parent=1 // pred_region
      %311 = dma.done [#allocation4], 256
    $region29: #{tpu_custom_call.1} parent=1 // pred_fallthru
      _
    %312 = vsyncpa [#allocation4], 1

</llo_original>
